<compile_context>
chip_gen: v7x
topology: tpu7x:2x2x1
jax: 0.10.0
libtpu: 0.0.40
codegen_flags: <defaults>
</compile_context>

<pallas_src>
import functools
import numpy as np

import jax
import jax.numpy as jnp
from jax.experimental import pallas as pl
from jax.experimental.pallas import tpu as pltpu

_LANES = 128


def _round_up(x, m):
    return ((x + m - 1) // m) * m


# ----------------------------------------------------------------------------
# Pallas kernel: trunk MLP + diagonal-Gaussian policy head
# ----------------------------------------------------------------------------
def _actor_kernel(obs_ref, emb_ref, noise_ref,
                  w1o_ref, w1e_ref, w2_ref, w3_ref, w4_ref,
                  bh_ref, b4_ref,
                  out_ref,
                  *, log_std_min, log_std_max, action_dim, a_pad):
    f32 = jnp.float32

    obs = obs_ref[...]          # (Bb, obs_dim)
    emb = emb_ref[...]          # (1, emb_dim)
    noise = noise_ref[...]      # (Bb, a_pad); only first `action_dim` lanes used

    # trunk: split first layer == Linear(concat(obs, emb)) without the concat
    h = jnp.dot(obs, w1o_ref[...], preferred_element_type=f32)
    h = h + jnp.dot(emb, w1e_ref[...], preferred_element_type=f32)   # (1,H) bcast
    h = jnp.maximum(h + bh_ref[0:1, :], 0.0)
    h = jnp.maximum(
        jnp.dot(h, w2_ref[...], preferred_element_type=f32) + bh_ref[1:2, :], 0.0)
    h = jnp.maximum(
        jnp.dot(h, w3_ref[...], preferred_element_type=f32) + bh_ref[2:3, :], 0.0)

    # heads: one lane-padded matmul, 128-aligned splits (no sub-vreg slicing)
    heads = jnp.dot(h, w4_ref[...], preferred_element_type=f32) + b4_ref[...]
    mu = heads[:, :a_pad]                  # lanes [0:action_dim] valid
    log_std = heads[:, a_pad:]             # lanes [0:action_dim] valid

    # log_std squashing to [log_std_min, log_std_max]
    log_std = jnp.tanh(log_std)
    log_std = log_std_min + 0.5 * (log_std_max - log_std_min) * (log_std + 1.0)

    # reparameterized sample
    std = jnp.exp(log_std)
    pi = mu + noise * std

    # lane mask: only the first `action_dim` lanes participate in reductions
    lane = jax.lax.broadcasted_iota(jnp.int32, mu.shape, dimension=1)
    valid = lane < action_dim

    # gaussian_logprob(noise, log_std)
    residual = jnp.sum(jnp.where(valid, -0.5 * noise * noise - log_std, 0.0),
                       axis=-1, keepdims=True)
    log_pi = residual - 0.5 * np.log(2.0 * np.pi) * action_dim

    # squash(mu, pi, log_pi)
    mu_t = jnp.tanh(mu)
    pi_t = jnp.tanh(pi)
    corr = jnp.where(valid,
                     jnp.log(jnp.maximum(1.0 - pi_t * pi_t, 0.0) + 1e-6),
                     0.0)
    log_pi = log_pi - jnp.sum(corr, axis=-1, keepdims=True)

    # single lane-dense output slab: 128-aligned, unmasked full-width stores
    out_ref[:, 0 * a_pad:1 * a_pad] = mu_t
    out_ref[:, 1 * a_pad:2 * a_pad] = pi_t
    out_ref[:, 2 * a_pad:3 * a_pad] = log_std
    out_ref[:, 3 * a_pad:4 * a_pad] = jnp.broadcast_to(log_pi, mu_t.shape)


# ----------------------------------------------------------------------------
# Wrapper
# ----------------------------------------------------------------------------
def actor_forward_pallas(obs, task_emb_row, noise_p, packed, *,
                         log_std_min, log_std_max, action_dim, block_b=None):
    """Distilled-actor forward pass; returns (mu, pi, log_pi, log_std)."""
    w1o, w1e, w2, w3, w4p, bh, b4p = packed
    B, obs_dim = obs.shape
    a_pad = noise_p.shape[-1]

    # Batch tiling: big tiles, weights stay VMEM-resident across the grid.
    if block_b is None:
        block_b = B if B <= 512 else 512    # small tiles vs VMEM (64 MiB on v7x)
    nb = pl.cdiv(B, block_b)

    kernel = functools.partial(
        _actor_kernel, log_std_min=log_std_min, log_std_max=log_std_max,
        action_dim=action_dim, a_pad=a_pad)

    def batch_spec(last):
        return pl.BlockSpec((block_b, last), lambda i: (i, 0))

    def resident_spec(shape):
        # same block every grid step -> loaded once, stays in VMEM
        return pl.BlockSpec(shape, lambda i, _n=len(shape): (0,) * _n)

    in_specs = [
        batch_spec(obs_dim),                 # obs
        resident_spec(task_emb_row.shape),   # selected task embedding row
        batch_spec(a_pad),                   # noise (lane-padded)
        resident_spec(w1o.shape),
        resident_spec(w1e.shape),
        resident_spec(w2.shape),
        resident_spec(w3.shape),
        resident_spec(w4p.shape),
        resident_spec(bh.shape),
        resident_spec(b4p.shape),
    ]

    slab = pl.pallas_call(
        kernel,
        out_shape=jax.ShapeDtypeStruct((B, 4 * a_pad), jnp.float32),
        grid=(nb,),
        in_specs=in_specs,
        out_specs=pl.BlockSpec((block_b, 4 * a_pad), lambda i: (i, 0)),
        compiler_params=pltpu.CompilerParams(
            dimension_semantics=("parallel",)),   # both TCs on v7x
    )(obs, task_emb_row, noise_p, w1o, w1e, w2, w3, w4p, bh, b4p)

    A = action_dim
    mu = slab[:, 0 * a_pad:0 * a_pad + A]
    pi = slab[:, 1 * a_pad:1 * a_pad + A]
    log_std = slab[:, 2 * a_pad:2 * a_pad + A]
    log_pi = slab[:, 3 * a_pad:3 * a_pad + 1]
    return mu, pi, log_pi, log_std


# ----------------------------------------------------------------------------
# Pure-JAX reference (mirrors the PyTorch forward exactly, unpacked params)
# ----------------------------------------------------------------------------
def actor_forward_ref(obs, task_emb_row, noise, params, *,
                      log_std_min, log_std_max, action_dim):
    w1, b1, w2, b2, w3, b3, w4, b4 = params
    B = obs.shape[0]
    task_emb = jnp.broadcast_to(task_emb_row, (B, task_emb_row.shape[-1]))
    obs_emb = jnp.concatenate([obs, task_emb], axis=-1)
    h = jnp.maximum(obs_emb @ w1 + b1, 0.0)
    h = jnp.maximum(h @ w2 + b2, 0.0)
    h = jnp.maximum(h @ w3 + b3, 0.0)
    out = h @ w4 + b4
    mu, log_std = out[:, :action_dim], out[:, action_dim:]
    log_std = jnp.tanh(log_std)
    log_std = log_std_min + 0.5 * (log_std_max - log_std_min) * (log_std + 1.0)
    std = jnp.exp(log_std)
    pi = mu + noise * std
    residual = jnp.sum(-0.5 * noise ** 2 - log_std, axis=-1, keepdims=True)
    log_pi = residual - 0.5 * np.log(2.0 * np.pi) * action_dim
    mu_t, pi_t = jnp.tanh(mu), jnp.tanh(pi)
    log_pi = log_pi - jnp.sum(
        jnp.log(jnp.maximum(1.0 - pi_t ** 2, 0.0) + 1e-6), axis=-1, keepdims=True)
    return mu_t, pi_t, log_pi, log_std


# ----------------------------------------------------------------------------
# Deterministic parameter init + one-time packing for the kernel layout
# ----------------------------------------------------------------------------
def init_params(key, obs_dim, emb_dim, hidden_dim, action_dim, num_tasks):
    d_in = obs_dim + emb_dim
    dims = [(d_in, hidden_dim), (hidden_dim, hidden_dim),
            (hidden_dim, hidden_dim), (hidden_dim, 2 * action_dim)]
    params = []
    keys = jax.random.split(key, 2 * len(dims) + 1)
    for n, (fan_in, fan_out) in enumerate(dims):
        w = jax.random.normal(keys[2 * n], (fan_in, fan_out), jnp.float32)
        w = w / np.sqrt(fan_in)
        b = 0.1 * jax.random.normal(keys[2 * n + 1], (fan_out,), jnp.float32)
        params += [w, b]
    # task embeddings: N(0, 1), one row per task (nn.ParameterList equivalent)
    task_embs = jax.random.normal(keys[-1], (num_tasks, emb_dim), jnp.float32)
    return tuple(params), task_embs


def pack_params(params, *, obs_dim, hidden_dim, action_dim, a_pad):
    """One-time repack of PyTorch-layout params into the kernel layout."""
    w1, b1, w2, b2, w3, b3, w4, b4 = params
    w1o = w1[:obs_dim, :]                               # (obs_dim, H)
    w1e = w1[obs_dim:, :]                               # (emb_dim, H)
    bh = jnp.stack([b1, b2, b3], axis=0)                # (3, H)
    w4p = jnp.zeros((hidden_dim, 2 * a_pad), jnp.float32)
    w4p = w4p.at[:, 0:action_dim].set(w4[:, :action_dim])                 # mu head
    w4p = w4p.at[:, a_pad:a_pad + action_dim].set(w4[:, action_dim:])     # log_std head
    b4p = jnp.zeros((1, 2 * a_pad), jnp.float32)
    b4p = b4p.at[0, 0:action_dim].set(b4[:action_dim])
    b4p = b4p.at[0, a_pad:a_pad + action_dim].set(b4[action_dim:])
    return (w1o, w1e, w2, w3, w4p, bh, b4p)


if __name__ == "__main__":
    # small shapes consistent with the module
    B, OBS_DIM, EMB_DIM, HIDDEN, ACTION_DIM, NUM_TASKS = 8, 24, 8, 32, 4, 3
    LOG_STD_MIN, LOG_STD_MAX = -10.0, 2.0
    TASK_IDX = 1
    A_PAD = _round_up(ACTION_DIM, _LANES)               # 128

    root = jax.random.PRNGKey(0)
    k_obs, k_noise, k_params = jax.random.split(root, 3)

    obs = jax.random.normal(k_obs, (B, OBS_DIM), jnp.float32)
    # lane-padded noise; only the first ACTION_DIM lanes are meaningful
    # (matches torch.randn_like(mu) for those lanes)
    noise_p = jax.random.normal(k_noise, (B, A_PAD), jnp.float32)
    params, task_embs = init_params(k_params, OBS_DIM, EMB_DIM, HIDDEN,
                                    ACTION_DIM, NUM_TASKS)

    # construct_input: task_idx indexes an nn.ParameterList, i.e. it is a
    # static Python int, so the row select is a compile-time slice here; the
    # obs || task_emb concat is fused into the kernel via the split w1.
    task_emb_row = task_embs[TASK_IDX][None, :]

    packed = pack_params(params, obs_dim=OBS_DIM, hidden_dim=HIDDEN,
                         action_dim=ACTION_DIM, a_pad=A_PAD)

    # TODO(synk): compute_pi=False / compute_log_pi=False config branches are
    # not specialized; this kernel always computes the full (mu, pi, log_pi) path.
    mu, pi, log_pi, log_std = actor_forward_pallas(
        obs, task_emb_row, noise_p, packed,
        log_std_min=LOG_STD_MIN, log_std_max=LOG_STD_MAX, action_dim=ACTION_DIM)
    jax.block_until_ready((mu, pi, log_pi, log_std))

    mu_r, pi_r, log_pi_r, log_std_r = actor_forward_ref(
        obs, task_emb_row, noise_p[:, :ACTION_DIM], params,
        log_std_min=LOG_STD_MIN, log_std_max=LOG_STD_MAX, action_dim=ACTION_DIM)

    np.testing.assert_allclose(np.asarray(mu), np.asarray(mu_r), rtol=1e-5, atol=1e-5)
    np.testing.assert_allclose(np.asarray(pi), np.asarray(pi_r), rtol=1e-5, atol=1e-5)
    np.testing.assert_allclose(np.asarray(log_pi), np.asarray(log_pi_r), rtol=1e-5, atol=1e-5)
    np.testing.assert_allclose(np.asarray(log_std), np.asarray(log_std_r), rtol=1e-5, atol=1e-5)

    print("KERNEL_OK")
</pallas_src>

<mosaic_0001>
module attributes {stable_mosaic.version = 11 : i64} {
  func.func @_actor_kernel(%arg0: i32, %arg1: memref<8x24xf32, #tpu.memory_space<vmem>>, %arg2: memref<1x8xf32, #tpu.memory_space<vmem>>, %arg3: memref<8x128xf32, #tpu.memory_space<vmem>>, %arg4: memref<24x32xf32, #tpu.memory_space<vmem>>, %arg5: memref<8x32xf32, #tpu.memory_space<vmem>>, %arg6: memref<32x32xf32, #tpu.memory_space<vmem>>, %arg7: memref<32x32xf32, #tpu.memory_space<vmem>>, %arg8: memref<32x256xf32, #tpu.memory_space<vmem>>, %arg9: memref<3x32xf32, #tpu.memory_space<vmem>>, %arg10: memref<1x256xf32, #tpu.memory_space<vmem>>, %arg11: memref<8x512xf32, #tpu.memory_space<vmem>>) attributes {dimension_semantics = [#tpu.dimension_semantics<parallel>], iteration_bounds = array<i64: 1>, scalar_prefetch = 0 : i64, scratch_operands = 0 : i64, tpu.core_type = #tpu.core_type<tc>, window_params = [{transform_indices = @transform_0, window_bounds = array<i64: 8, 24>}, {pipeline_mode = #tpu.pipeline_mode<synchronous>, transform_indices = @transform_1, window_bounds = array<i64: 1, 8>}, {transform_indices = @transform_2, window_bounds = array<i64: 8, 128>}, {pipeline_mode = #tpu.pipeline_mode<synchronous>, transform_indices = @transform_3, window_bounds = array<i64: 24, 32>}, {pipeline_mode = #tpu.pipeline_mode<synchronous>, transform_indices = @transform_4, window_bounds = array<i64: 8, 32>}, {pipeline_mode = #tpu.pipeline_mode<synchronous>, transform_indices = @transform_5, window_bounds = array<i64: 32, 32>}, {pipeline_mode = #tpu.pipeline_mode<synchronous>, transform_indices = @transform_6, window_bounds = array<i64: 32, 32>}, {pipeline_mode = #tpu.pipeline_mode<synchronous>, transform_indices = @transform_7, window_bounds = array<i64: 32, 256>}, {pipeline_mode = #tpu.pipeline_mode<synchronous>, transform_indices = @transform_8, window_bounds = array<i64: 3, 32>}, {pipeline_mode = #tpu.pipeline_mode<synchronous>, transform_indices = @transform_9, window_bounds = array<i64: 1, 256>}, {transform_indices = @transform_10, window_bounds = array<i64: 8, 512>}]} {
    %c0 = arith.constant 0 : index
    %c0_0 = arith.constant 0 : index
    %0 = vector.load %arg1[%c0, %c0_0] : memref<8x24xf32, #tpu.memory_space<vmem>>, vector<8x24xf32>
    %c0_1 = arith.constant 0 : index
    %c0_2 = arith.constant 0 : index
    %1 = vector.load %arg2[%c0_1, %c0_2] : memref<1x8xf32, #tpu.memory_space<vmem>>, vector<1x8xf32>
    %c0_3 = arith.constant 0 : index
    %c0_4 = arith.constant 0 : index
    %2 = vector.load %arg3[%c0_3, %c0_4] : memref<8x128xf32, #tpu.memory_space<vmem>>, vector<8x128xf32>
    %c0_5 = arith.constant 0 : index
    %c0_6 = arith.constant 0 : index
    %3 = vector.load %arg4[%c0_5, %c0_6] : memref<24x32xf32, #tpu.memory_space<vmem>>, vector<24x32xf32>
    %cst = arith.constant dense<0.000000e+00> : vector<8x32xf32>
    %4 = tpu.matmul %0, %3, %cst {dimension_numbers = #tpu.dot_dimension_numbers<[1], [0], [0], [1], [0, 0, 1, 1], [], []>} : vector<8x24xf32>, vector<24x32xf32>, vector<8x32xf32> -> vector<8x32xf32>
    %c0_7 = arith.constant 0 : index
    %c0_8 = arith.constant 0 : index
    %5 = vector.load %arg5[%c0_7, %c0_8] : memref<8x32xf32, #tpu.memory_space<vmem>>, vector<8x32xf32>
    %cst_9 = arith.constant dense<0.000000e+00> : vector<1x32xf32>
    %6 = tpu.matmul %1, %5, %cst_9 {dimension_numbers = #tpu.dot_dimension_numbers<[1], [0], [0], [1], [0, 0, 1, 1], [], []>} : vector<1x8xf32>, vector<8x32xf32>, vector<1x32xf32> -> vector<1x32xf32>
    %7 = vector.broadcast %6 : vector<1x32xf32> to vector<8x32xf32>
    %8 = arith.addf %4, %7 : vector<8x32xf32>
    %c0_10 = arith.constant 0 : index
    %c0_11 = arith.constant 0 : index
    %9 = vector.load %arg9[%c0_10, %c0_11] : memref<3x32xf32, #tpu.memory_space<vmem>>, vector<1x32xf32>
    %10 = vector.broadcast %9 : vector<1x32xf32> to vector<8x32xf32>
    %11 = arith.addf %8, %10 : vector<8x32xf32>
    %cst_12 = arith.constant 0.000000e+00 : f32
    %12 = vector.broadcast %cst_12 : f32 to vector<8x32xf32>
    %13 = arith.maximumf %11, %12 : vector<8x32xf32>
    %c0_13 = arith.constant 0 : index
    %c0_14 = arith.constant 0 : index
    %14 = vector.load %arg6[%c0_13, %c0_14] : memref<32x32xf32, #tpu.memory_space<vmem>>, vector<32x32xf32>
    %cst_15 = arith.constant dense<0.000000e+00> : vector<8x32xf32>
    %15 = tpu.matmul %13, %14, %cst_15 {dimension_numbers = #tpu.dot_dimension_numbers<[1], [0], [0], [1], [0, 0, 1, 1], [], []>} : vector<8x32xf32>, vector<32x32xf32>, vector<8x32xf32> -> vector<8x32xf32>
    %c1 = arith.constant 1 : index
    %c0_16 = arith.constant 0 : index
    %16 = vector.load %arg9[%c1, %c0_16] : memref<3x32xf32, #tpu.memory_space<vmem>>, vector<1x32xf32>
    %17 = vector.broadcast %16 : vector<1x32xf32> to vector<8x32xf32>
    %18 = arith.addf %15, %17 : vector<8x32xf32>
    %cst_17 = arith.constant 0.000000e+00 : f32
    %19 = vector.broadcast %cst_17 : f32 to vector<8x32xf32>
    %20 = arith.maximumf %18, %19 : vector<8x32xf32>
    %c0_18 = arith.constant 0 : index
    %c0_19 = arith.constant 0 : index
    %21 = vector.load %arg7[%c0_18, %c0_19] : memref<32x32xf32, #tpu.memory_space<vmem>>, vector<32x32xf32>
    %cst_20 = arith.constant dense<0.000000e+00> : vector<8x32xf32>
    %22 = tpu.matmul %20, %21, %cst_20 {dimension_numbers = #tpu.dot_dimension_numbers<[1], [0], [0], [1], [0, 0, 1, 1], [], []>} : vector<8x32xf32>, vector<32x32xf32>, vector<8x32xf32> -> vector<8x32xf32>
    %c2 = arith.constant 2 : index
    %c0_21 = arith.constant 0 : index
    %23 = vector.load %arg9[%c2, %c0_21] : memref<3x32xf32, #tpu.memory_space<vmem>>, vector<1x32xf32>
    %24 = vector.broadcast %23 : vector<1x32xf32> to vector<8x32xf32>
    %25 = arith.addf %22, %24 : vector<8x32xf32>
    %cst_22 = arith.constant 0.000000e+00 : f32
    %26 = vector.broadcast %cst_22 : f32 to vector<8x32xf32>
    %27 = arith.maximumf %25, %26 : vector<8x32xf32>
    %c0_23 = arith.constant 0 : index
    %c0_24 = arith.constant 0 : index
    %28 = vector.load %arg8[%c0_23, %c0_24] : memref<32x256xf32, #tpu.memory_space<vmem>>, vector<32x256xf32>
    %cst_25 = arith.constant dense<0.000000e+00> : vector<8x256xf32>
    %29 = tpu.matmul %27, %28, %cst_25 {dimension_numbers = #tpu.dot_dimension_numbers<[1], [0], [0], [1], [0, 0, 1, 1], [], []>} : vector<8x32xf32>, vector<32x256xf32>, vector<8x256xf32> -> vector<8x256xf32>
    %c0_26 = arith.constant 0 : index
    %c0_27 = arith.constant 0 : index
    %30 = vector.load %arg10[%c0_26, %c0_27] : memref<1x256xf32, #tpu.memory_space<vmem>>, vector<1x256xf32>
    %31 = vector.broadcast %30 : vector<1x256xf32> to vector<8x256xf32>
    %32 = arith.addf %29, %31 : vector<8x256xf32>
    %33 = vector.extract_strided_slice %32 {offsets = [0, 0], sizes = [8, 128], strides = [1, 1]} : vector<8x256xf32> to vector<8x128xf32>
    %34 = vector.extract_strided_slice %32 {offsets = [0, 128], sizes = [8, 128], strides = [1, 1]} : vector<8x256xf32> to vector<8x128xf32>
    %35 = math.tanh %34 : vector<8x128xf32>
    %cst_28 = arith.constant 1.000000e+00 : f32
    %36 = vector.broadcast %cst_28 : f32 to vector<8x128xf32>
    %37 = arith.addf %35, %36 : vector<8x128xf32>
    %cst_29 = arith.constant 6.000000e+00 : f32
    %38 = vector.broadcast %cst_29 : f32 to vector<8x128xf32>
    %39 = arith.mulf %38, %37 : vector<8x128xf32>
    %cst_30 = arith.constant -1.000000e+01 : f32
    %40 = vector.broadcast %cst_30 : f32 to vector<8x128xf32>
    %41 = arith.addf %40, %39 : vector<8x128xf32>
    %42 = math.exp %41 : vector<8x128xf32>
    %43 = arith.mulf %2, %42 : vector<8x128xf32>
    %44 = arith.addf %33, %43 : vector<8x128xf32>
    %45 = tpu.iota {dimensions = array<i32: 1>} : vector<8x128xi32>
    %c4_i32 = arith.constant 4 : i32
    %46 = vector.broadcast %c4_i32 : i32 to vector<8x128xi32>
    %47 = arith.cmpi slt, %45, %46 : vector<8x128xi32>
    %cst_31 = arith.constant -5.000000e-01 : f32
    %48 = vector.broadcast %cst_31 : f32 to vector<8x128xf32>
    %49 = arith.mulf %48, %2 : vector<8x128xf32>
    %50 = arith.mulf %49, %2 : vector<8x128xf32>
    %51 = arith.subf %50, %41 : vector<8x128xf32>
    %cst_32 = arith.constant 0.000000e+00 : f32
    %52 = vector.broadcast %cst_32 : f32 to vector<8x128xf32>
    %53 = arith.select %47, %51, %52 : vector<8x128xi1>, vector<8x128xf32>
    %cst_33 = arith.constant dense<0.000000e+00> : vector<8xf32>
    %54 = vector.multi_reduction <add>, %53, %cst_33 [1] : vector<8x128xf32> to vector<8xf32>
    %55 = vector.shape_cast %54 : vector<8xf32> to vector<8x1xf32>
    %cst_34 = arith.constant 3.67575407 : f32
    %56 = vector.broadcast %cst_34 : f32 to vector<8x1xf32>
    %57 = arith.subf %55, %56 : vector<8x1xf32>
    %58 = math.tanh %33 : vector<8x128xf32>
    %59 = math.tanh %44 : vector<8x128xf32>
    %60 = arith.mulf %59, %59 : vector<8x128xf32>
    %cst_35 = arith.constant 1.000000e+00 : f32
    %61 = vector.broadcast %cst_35 : f32 to vector<8x128xf32>
    %62 = arith.subf %61, %60 : vector<8x128xf32>
    %cst_36 = arith.constant 0.000000e+00 : f32
    %63 = vector.broadcast %cst_36 : f32 to vector<8x128xf32>
    %64 = arith.maximumf %62, %63 : vector<8x128xf32>
    %cst_37 = arith.constant 9.99999997E-7 : f32
    %65 = vector.broadcast %cst_37 : f32 to vector<8x128xf32>
    %66 = arith.addf %64, %65 : vector<8x128xf32>
    %67 = math.log %66 : vector<8x128xf32>
    %cst_38 = arith.constant 0.000000e+00 : f32
    %68 = vector.broadcast %cst_38 : f32 to vector<8x128xf32>
    %69 = arith.select %47, %67, %68 : vector<8x128xi1>, vector<8x128xf32>
    %cst_39 = arith.constant dense<0.000000e+00> : vector<8xf32>
    %70 = vector.multi_reduction <add>, %69, %cst_39 [1] : vector<8x128xf32> to vector<8xf32>
    %71 = vector.shape_cast %70 : vector<8xf32> to vector<8x1xf32>
    %72 = arith.subf %57, %71 : vector<8x1xf32>
    %c0_40 = arith.constant 0 : index
    %c0_41 = arith.constant 0 : index
    %73 = vector.load %arg11[%c0_40, %c0_41] : memref<8x512xf32, #tpu.memory_space<vmem>>, vector<8x128xf32>
    tpu.vector_store %arg11[%c0_40, %c0_41], %58 {strides = array<i32>} : memref<8x512xf32, #tpu.memory_space<vmem>>, vector<8x128xf32>,
    %c0_42 = arith.constant 0 : index
    %c128 = arith.constant 128 : index
    %74 = vector.load %arg11[%c0_42, %c128] : memref<8x512xf32, #tpu.memory_space<vmem>>, vector<8x128xf32>
    tpu.vector_store %arg11[%c0_42, %c128], %59 {strides = array<i32>} : memref<8x512xf32, #tpu.memory_space<vmem>>, vector<8x128xf32>,
    %c0_43 = arith.constant 0 : index
    %c256 = arith.constant 256 : index
    %75 = vector.load %arg11[%c0_43, %c256] : memref<8x512xf32, #tpu.memory_space<vmem>>, vector<8x128xf32>
    tpu.vector_store %arg11[%c0_43, %c256], %41 {strides = array<i32>} : memref<8x512xf32, #tpu.memory_space<vmem>>, vector<8x128xf32>,
    %76 = vector.shape_cast %72 : vector<8x1xf32> to vector<8x1xf32>
    %77 = vector.broadcast %76 : vector<8x1xf32> to vector<8x128xf32>
    %c0_44 = arith.constant 0 : index
    %c384 = arith.constant 384 : index
    %78 = vector.load %arg11[%c0_44, %c384] : memref<8x512xf32, #tpu.memory_space<vmem>>, vector<8x128xf32>
    tpu.vector_store %arg11[%c0_44, %c384], %77 {strides = array<i32>} : memref<8x512xf32, #tpu.memory_space<vmem>>, vector<8x128xf32>,
    return
  }
  func.func @transform_0(%arg0: i32) -> (i32, i32) {
    %c0_i32 = arith.constant 0 : i32
    %c0_i32_0 = arith.constant 0 : i32
    return %arg0, %c0_i32 : i32, i32
  }
  func.func @transform_1(%arg0: i32) -> (i32, i32) {
    %c0_i32 = arith.constant 0 : i32
    %c0_i32_0 = arith.constant 0 : i32
    %c0_i32_1 = arith.constant 0 : i32
    return %c0_i32, %c0_i32_0 : i32, i32
  }
  func.func @transform_2(%arg0: i32) -> (i32, i32) {
    %c0_i32 = arith.constant 0 : i32
    %c0_i32_0 = arith.constant 0 : i32
    return %arg0, %c0_i32 : i32, i32
  }
  func.func @transform_3(%arg0: i32) -> (i32, i32) {
    %c0_i32 = arith.constant 0 : i32
    %c0_i32_0 = arith.constant 0 : i32
    %c0_i32_1 = arith.constant 0 : i32
    return %c0_i32, %c0_i32_0 : i32, i32
  }
  func.func @transform_4(%arg0: i32) -> (i32, i32) {
    %c0_i32 = arith.constant 0 : i32
    %c0_i32_0 = arith.constant 0 : i32
    %c0_i32_1 = arith.constant 0 : i32
    return %c0_i32, %c0_i32_0 : i32, i32
  }
  func.func @transform_5(%arg0: i32) -> (i32, i32) {
    %c0_i32 = arith.constant 0 : i32
    %c0_i32_0 = arith.constant 0 : i32
    %c0_i32_1 = arith.constant 0 : i32
    return %c0_i32, %c0_i32_0 : i32, i32
  }
  func.func @transform_6(%arg0: i32) -> (i32, i32) {
    %c0_i32 = arith.constant 0 : i32
    %c0_i32_0 = arith.constant 0 : i32
    %c0_i32_1 = arith.constant 0 : i32
    return %c0_i32, %c0_i32_0 : i32, i32
  }
  func.func @transform_7(%arg0: i32) -> (i32, i32) {
    %c0_i32 = arith.constant 0 : i32
    %c0_i32_0 = arith.constant 0 : i32
    %c0_i32_1 = arith.constant 0 : i32
    return %c0_i32, %c0_i32_0 : i32, i32
  }
  func.func @transform_8(%arg0: i32) -> (i32, i32) {
    %c0_i32 = arith.constant 0 : i32
    %c0_i32_0 = arith.constant 0 : i32
    %c0_i32_1 = arith.constant 0 : i32
    return %c0_i32, %c0_i32_0 : i32, i32
  }
  func.func @transform_9(%arg0: i32) -> (i32, i32) {
    %c0_i32 = arith.constant 0 : i32
    %c0_i32_0 = arith.constant 0 : i32
    %c0_i32_1 = arith.constant 0 : i32
    return %c0_i32, %c0_i32_0 : i32, i32
  }
  func.func @transform_10(%arg0: i32) -> (i32, i32) {
    %c0_i32 = arith.constant 0 : i32
    %c0_i32_0 = arith.constant 0 : i32
    return %arg0, %c0_i32 : i32, i32
  }
}

</mosaic_0001>

<llo_original>
// kernel: tpu_custom_call.1
$region0: #{tpu_custom_call.1}
  #allocation0 [shape = 'u32[]', space=smem, size = 0x4, offset = 0x4, fixed_abs, tag = 'smem constant byte address 0x4 - core index']
  #allocation1 [shape = 'u32[144,128]{1,0:T(1,128)}', space=vmem, size = 0x12000, scoped, tag = 'internal scratch']
  %s0 = inlined_call_operand.hbm [shape: f32[8,24], index: 0, kind: input, shape index: {}]
  %s1 = inlined_call_operand.vmem [shape: f32[1,8], index: 1, kind: input, shape index: {}]
  %s2 = inlined_call_operand.hbm [shape: f32[8,128], index: 2, kind: input, shape index: {}]
  %s3 = inlined_call_operand.hbm [shape: f32[24,32], index: 3, kind: input, shape index: {}]
  %s4 = inlined_call_operand.vmem [shape: f32[8,32], index: 4, kind: input, shape index: {}]
  %s5 = inlined_call_operand.hbm [shape: f32[32,32], index: 5, kind: input, shape index: {}]
  %s6 = inlined_call_operand.hbm [shape: f32[32,32], index: 6, kind: input, shape index: {}]
  %s7 = inlined_call_operand.hbm [shape: f32[32,256], index: 7, kind: input, shape index: {}]
  %s8 = inlined_call_operand.vmem [shape: f32[3,32], index: 8, kind: input, shape index: {}]
  %s9 = inlined_call_operand.vmem [shape: f32[1,256], index: 9, kind: input, shape index: {}]
  %s10 = inlined_call_operand.hbm [shape: f32[8,512], index: 10, kind: output, shape index: {}]
  %s11 = sld [smem:[#allocation0]]
  $region74: #{tpu_custom_call.1} parent=0
    _
  %s13 = ssub.s32 1, %s11
  %s14 = scalar_select 0, %s13, %s11
  $region1: #{tpu_custom_call.1} parent=0
    #allocation2 [shape = 'u8[4096]{0}', space=vmem, size = 0x1000, scoped, tag = 'input window, operand 0, single buffered']
    #allocation3 [shape = 's32[1]{0}', space=sflag, size = 0x4, scoped, tag = 'scoped memory for tpu_custom_call.1']
    #allocation4 [shape = 's32[1]{0}', space=sflag, size = 0x4, scoped, tag = 'scoped memory for tpu_custom_call.1']
    #allocation5 [shape = 'u8[4096]{0}', space=vmem, size = 0x1000, scoped, tag = 'input window, operand 2, single buffered']
    #allocation6 [shape = 's32[1]{0}', space=sflag, size = 0x4, scoped, tag = 'scoped memory for tpu_custom_call.1']
    #allocation7 [shape = 'u8[12288]{0}', space=vmem, size = 0x3000, scoped, tag = 'input window, operand 3, single buffered']
    #allocation8 [shape = 'u8[16384]{0}', space=vmem, size = 0x4000, scoped, tag = 'input window, operand 5, single buffered']
    #allocation9 [shape = 's32[1]{0}', space=sflag, size = 0x4, scoped, tag = 'scoped memory for tpu_custom_call.1']
    #allocation10 [shape = 'u8[16384]{0}', space=vmem, size = 0x4000, scoped, tag = 'input window, operand 6, single buffered']
    #allocation11 [shape = 'u8[32768]{0}', space=vmem, size = 0x8000, scoped, tag = 'input window, operand 7, single buffered']
    #allocation12 [shape = 's32[1]{0}', space=sflag, size = 0x4, scoped, tag = 'scoped memory for tpu_custom_call.1']
    #allocation13 [shape = 'u8[16384]{0}', space=vmem, size = 0x4000, scoped, tag = 'output window, operand 0, single buffered']
    %15 = vsyncpa [#allocation3], 0
    %16 = vsyncpa [#allocation6], 0
    %17 = vsyncpa [#allocation9], 0
    %18 = vsyncpa [#allocation12], 0
    %19 = vsyncpa [#allocation4], 0
    // Predicated region
    $region2: #{tpu_custom_call.1} parent=1 // pred_check
      _
    $region3: #{tpu_custom_call.1} parent=1 // pred_check_branch
      %21 = sbr.rel (0) target = $region5
    $region4: #{tpu_custom_call.1} parent=1 // pred_region
      %s23 = ssub.s32 128, 128
      %24 = vsyncadd [#allocation3], %s23
      %s26 = sshll.u32 [#allocation2], 4
      %s27 = int_to_ptr.vmem [resolvable:$true] %s26
      %29 = dma.hbm_to_vmem [thread:$0]  %s0, 128, %s27, [#allocation3]
    $region5: #{tpu_custom_call.1} parent=1 // pred_fallthru
      _
    // Predicated region
    $region6: #{tpu_custom_call.1} parent=1 // pred_check
      _
    $region7: #{tpu_custom_call.1} parent=1 // pred_check_branch
      %31 = sbr.rel (0) target = $region9
    $region8: #{tpu_custom_call.1} parent=1 // pred_region
      _
    $region9: #{tpu_custom_call.1} parent=1 // pred_fallthru
      _
    // Predicated region
    $region10: #{tpu_custom_call.1} parent=1 // pred_check
      _
    $region11: #{tpu_custom_call.1} parent=1 // pred_check_branch
      %33 = sbr.rel (0) target = $region13
    $region12: #{tpu_custom_call.1} parent=1 // pred_region
      %s35 = ssub.s32 128, 128
      %36 = vsyncadd [#allocation6], %s35
      %s38 = sshll.u32 [#allocation5], 4
      %s39 = int_to_ptr.vmem [resolvable:$true] %s38
      %41 = dma.hbm_to_vmem [thread:$0]  %s2, 128, %s39, [#allocation6]
    $region13: #{tpu_custom_call.1} parent=1 // pred_fallthru
      _
    // Predicated region
    $region14: #{tpu_custom_call.1} parent=1 // pred_check
      _
    $region15: #{tpu_custom_call.1} parent=1 // pred_check_branch
      %43 = sbr.rel (0) target = $region17
    $region16: #{tpu_custom_call.1} parent=1 // pred_region
      %s45 = ssub.s32 384, 384
      %46 = vsyncadd [#allocation6], %s45
      %s47 = sshll.u32 [#allocation7], 4
      %s48 = int_to_ptr.vmem [resolvable:$true] %s47
      %53 = dma.hbm_to_vmem [thread:$0]  %s3, 384, %s48, [#allocation6], 128, 128, 8
    $region17: #{tpu_custom_call.1} parent=1 // pred_fallthru
      _
    // Predicated region
    $region18: #{tpu_custom_call.1} parent=1 // pred_check
      _
    $region19: #{tpu_custom_call.1} parent=1 // pred_check_branch
      %55 = sbr.rel (0) target = $region21
    $region20: #{tpu_custom_call.1} parent=1 // pred_region
      _
    $region21: #{tpu_custom_call.1} parent=1 // pred_fallthru
      _
    // Predicated region
    $region22: #{tpu_custom_call.1} parent=1 // pred_check
      _
    $region23: #{tpu_custom_call.1} parent=1 // pred_check_branch
      %57 = sbr.rel (0) target = $region25
    $region24: #{tpu_custom_call.1} parent=1 // pred_region
      %s59 = ssub.s32 512, 512
      %60 = vsyncadd [#allocation9], %s59
      %s61 = sshll.u32 [#allocation8], 4
      %s62 = int_to_ptr.vmem [resolvable:$true] %s61
      %67 = dma.hbm_to_vmem [thread:$0]  %s5, 512, %s62, [#allocation9], 128, 128, 8
    $region25: #{tpu_custom_call.1} parent=1 // pred_fallthru
      _
    // Predicated region
    $region26: #{tpu_custom_call.1} parent=1 // pred_check
      _
    $region27: #{tpu_custom_call.1} parent=1 // pred_check_branch
      %69 = sbr.rel (0) target = $region29
    $region28: #{tpu_custom_call.1} parent=1 // pred_region
      %s71 = ssub.s32 512, 512
      %72 = vsyncadd [#allocation9], %s71
      %s73 = sshll.u32 [#allocation10], 4
      %s74 = int_to_ptr.vmem [resolvable:$true] %s73
      %79 = dma.hbm_to_vmem [thread:$0]  %s6, 512, %s74, [#allocation9], 128, 128, 8
    $region29: #{tpu_custom_call.1} parent=1 // pred_fallthru
      _
    // Predicated region
    $region30: #{tpu_custom_call.1} parent=1 // pred_check
      _
    $region31: #{tpu_custom_call.1} parent=1 // pred_check_branch
      %81 = sbr.rel (0) target = $region33
    $region32: #{tpu_custom_call.1} parent=1 // pred_region
      %s83 = ssub.s32 1024, 1024
      %84 = vsyncadd [#allocation12], %s83
      %s85 = sshll.u32 [#allocation11], 4
      %s86 = int_to_ptr.vmem [resolvable:$true] %s85
      %91 = dma.hbm_to_vmem [thread:$0]  %s7, 1024, %s86, [#allocation12], 256, 256, 16
    $region33: #{tpu_custom_call.1} parent=1 // pred_fallthru
      _
    // Predicated region
    $region34: #{tpu_custom_call.1} parent=1 // pred_check
      _
    $region35: #{tpu_custom_call.1} parent=1 // pred_check_branch
      %93 = sbr.rel (0) target = $region37
    $region36: #{tpu_custom_call.1} parent=1 // pred_region
      _
    $region37: #{tpu_custom_call.1} parent=1 // pred_fallthru
      _
    // Predicated region
    $region38: #{tpu_custom_call.1} parent=1 // pred_check
      _
    $region39: #{tpu_custom_call.1} parent=1 // pred_check_branch
      %95 = sbr.rel (0) target = $region41
    $region40: #{tpu_custom_call.1} parent=1 // pred_region
      _
    $region41: #{tpu_custom_call.1} parent=1 // pred_fallthru
      _
    // Predicated region
    $region42: #{tpu_custom_call.1} parent=1 // pred_check
      _
    $region43: #{tpu_custom_call.1} parent=1 // pred_check_branch
      %97 = sbr.rel (0) target = $region45
    $region44: #{tpu_custom_call.1} parent=1 // pred_region
      %98 = dma.done [#allocation3], 128
    $region45: #{tpu_custom_call.1} parent=1 // pred_fallthru
      _
    // Predicated region
    $region46: #{tpu_custom_call.1} parent=1 // pred_check
      _
    $region47: #{tpu_custom_call.1} parent=1 // pred_check_branch
      %100 = sbr.rel (0) target = $region49
    $region48: #{tpu_custom_call.1} parent=1 // pred_region
      %101 = dma.done [#allocation6], 128
    $region49: #{tpu_custom_call.1} parent=1 // pred_fallthru
      _
    // Predicated region
    $region50: #{tpu_custom_call.1} parent=1 // pred_check
      _
    $region51: #{tpu_custom_call.1} parent=1 // pred_check_branch
      %103 = sbr.rel (0) target = $region53
    $region52: #{tpu_custom_call.1} parent=1 // pred_region
      %104 = dma.done [#allocation6], 384
    $region53: #{tpu_custom_call.1} parent=1 // pred_fallthru
      _
    // Predicated region
    $region54: #{tpu_custom_call.1} parent=1 // pred_check
      _
    $region55: #{tpu_custom_call.1} parent=1 // pred_check_branch
      %106 = sbr.rel (0) target = $region57
    $region56: #{tpu_custom_call.1} parent=1 // pred_region
      %107 = dma.done [#allocation9], 512
    $region57: #{tpu_custom_call.1} parent=1 // pred_fallthru
      _
    // Predicated region
    $region58: #{tpu_custom_call.1} parent=1 // pred_check
      _
    $region59: #{tpu_custom_call.1} parent=1 // pred_check_branch
      %109 = sbr.rel (0) target = $region61
    $region60: #{tpu_custom_call.1} parent=1 // pred_region
      %110 = dma.done [#allocation9], 512
    $region61: #{tpu_custom_call.1} parent=1 // pred_fallthru
      _
    // Predicated region
    $region62: #{tpu_custom_call.1} parent=1 // pred_check
      _
    $region63: #{tpu_custom_call.1} parent=1 // pred_check_branch
      %112 = sbr.rel (0) target = $region65
    $region64: #{tpu_custom_call.1} parent=1 // pred_region
      %113 = dma.done [#allocation12], 1024
    $region65: #{tpu_custom_call.1} parent=1 // pred_fallthru
      _
    %v114 = vld [vmem:[#allocation2] sm:$0xff]
    %v115 = vld [vmem:[%s1] sm:$0x1]
    %v116 = vld [vmem:[#allocation5] sm:$0xff]
    %v117 = vld [vmem:[#allocation7] sm:$0xff]
    %v118 = vld [vmem:[#allocation7 + $0x8] sm:$0xff]
    %v119 = vld [vmem:[#allocation7 + $0x10] sm:$0xff]
    %v120 = vld [vmem:[%s4] sm:$0xff]
    %vm121 = vcmask 64512
    %v123 = vsel %vm121, %v115, 0
    %125 = vmatprep.subr.mxu0 0.0
    %126 = vmatpush1.msra.mxu0 %v120
    %127 = vmatprep.subr.mxu0 0.0
    %128 = vmatpush1.msra.mxu0 0.0
    %129 = vmatprep.subr.mxu0 0.0
    %130 = vmatpush1.msra.mxu0 0.0
    %131 = vmatprep.subr.mxu0 0.0
    %132 = vmatpush1.msra.mxu0 0.0
    %133 = vmatprep.subr.mxu0 0.0
    %134 = vmatpush1.msra.mxu0 0.0
    %135 = vmatprep.subr.mxu0 0.0
    %136 = vmatpush1.msra.mxu0 0.0
    %137 = vmatprep.subr.mxu0 0.0
    %138 = vmatpush1.msra.mxu0 0.0
    %139 = vmatprep.subr.mxu0 0.0
    %140 = vmatpush1.msra.mxu0 0.0
    %141 = vmatprep.subr.mxu0 0.0
    %142 = vmatpush1.msra.mxu0 0.0
    %143 = vmatprep.subr.mxu0 0.0
    %144 = vmatpush1.msra.mxu0 0.0
    %145 = vmatprep.subr.mxu0 0.0
    %146 = vmatpush1.msra.mxu0 0.0
    %147 = vmatprep.subr.mxu0 0.0
    %148 = vmatpush1.msra.mxu0 0.0
    %149 = vmatprep.subr.mxu0 0.0
    %150 = vmatpush1.msra.mxu0 0.0
    %151 = vmatprep.subr.mxu0 0.0
    %152 = vmatpush1.msra.mxu0 0.0
    %153 = vmatprep.subr.mxu0 0.0
    %154 = vmatpush1.msra.mxu0 0.0
    %155 = vmatprep.subr.mxu0 0.0
    %156 = vmatpush1.msra.mxu0 0.0
    %157 = vmatprep.subr.mxu0 0.0
    %158 = vmatpush1.msra.mxu0 0.0
    %159 = vmatprep.subr.mxu0 0.0
    %160 = vmatpush1.msra.mxu0 0.0
    %161 = vmatprep.subr.mxu0 0.0
    %162 = vmatpush1.msra.mxu0 0.0
    %163 = vmatprep.subr.mxu0 0.0
    %164 = vmatpush1.msra.mxu0 0.0
    %165 = vmatprep.subr.mxu0 0.0
    %166 = vmatpush1.msra.mxu0 0.0
    %167 = vmatprep.subr.mxu0 0.0
    %168 = vmatpush1.msra.mxu0 0.0
    %169 = vmatprep.subr.mxu0 0.0
    %170 = vmatpush1.msra.mxu0 0.0
    %171 = vmatprep.subr.mxu0 0.0
    %172 = vmatpush1.msra.mxu0 0.0
    %173 = vmatprep.subr.mxu0 0.0
    %174 = vmatpush1.msra.mxu0 0.0
    %175 = vmatprep.subr.mxu0 0.0
    %176 = vmatpush1.msra.mxu0 0.0
    %177 = vmatprep.subr.mxu0 0.0
    %178 = vmatpush1.msra.mxu0 0.0
    %179 = vmatprep.subr.mxu0 0.0
    %180 = vmatpush1.msra.mxu0 0.0
    %181 = vmatprep.subr.mxu0 0.0
    %182 = vmatpush1.msra.mxu0 0.0
    %183 = vmatprep.subr.mxu0 0.0
    %184 = vmatpush1.msra.mxu0 0.0
    %185 = vmatprep.subr.mxu0 0.0
    %186 = vmatpush1.msra.mxu0 0.0
    %187 = vmatprep.subr.mxu0 0.0
    %188 = vmatpush1.msra.mxu0 0.0
    %189 = vmatprep.mubr.f32.mxu0 0.0
    %190 = vmatmul.mubr.f32.gmra.mrb[0].mxu0 %v123
    %v191 = vpop.f32.mrb[0].mxu0
    %v192 = vadd.f32 0.0, %v191
    %v193 = vpop.f32.mrb[0].mxu0
    %194 = vdwg.mxu0
    %v195 = vlaneseq
    %v196 = vshrl.u32 %v195, 7
    %v197 = vsub.s32 0, %v196
    %v198 = vrot.slane %v192, %v197
    %vm199 = vcmask 195584
    %v201 = vsel %vm199, %v114, 0
    %203 = vmatprep.subr.mxu0 0.0
    %204 = vmatpush1.msra.mxu0 %v117
    %205 = vmatprep.subr.mxu0 0.0
    %206 = vmatpush1.msra.mxu0 %v118
    %207 = vmatprep.subr.mxu0 0.0
    %208 = vmatpush1.msra.mxu0 %v119
    %209 = vmatprep.subr.mxu0 0.0
    %210 = vmatpush1.msra.mxu0 0.0
    %211 = vmatprep.subr.mxu0 0.0
    %212 = vmatpush1.msra.mxu0 0.0
    %213 = vmatprep.subr.mxu0 0.0
    %214 = vmatpush1.msra.mxu0 0.0
    %215 = vmatprep.subr.mxu0 0.0
    %216 = vmatpush1.msra.mxu0 0.0
    %217 = vmatprep.subr.mxu0 0.0
    %218 = vmatpush1.msra.mxu0 0.0
    %219 = vmatprep.subr.mxu0 0.0
    %220 = vmatpush1.msra.mxu0 0.0
    %221 = vmatprep.subr.mxu0 0.0
    %222 = vmatpush1.msra.mxu0 0.0
    %223 = vmatprep.subr.mxu0 0.0
    %224 = vmatpush1.msra.mxu0 0.0
    %225 = vmatprep.subr.mxu0 0.0
    %226 = vmatpush1.msra.mxu0 0.0
    %227 = vmatprep.subr.mxu0 0.0
    %228 = vmatpush1.msra.mxu0 0.0
    %229 = vmatprep.subr.mxu0 0.0
    %230 = vmatpush1.msra.mxu0 0.0
    %231 = vmatprep.subr.mxu0 0.0
    %232 = vmatpush1.msra.mxu0 0.0
    %233 = vmatprep.subr.mxu0 0.0
    %234 = vmatpush1.msra.mxu0 0.0
    %235 = vmatprep.subr.mxu0 0.0
    %236 = vmatpush1.msra.mxu0 0.0
    %237 = vmatprep.subr.mxu0 0.0
    %238 = vmatpush1.msra.mxu0 0.0
    %239 = vmatprep.subr.mxu0 0.0
    %240 = vmatpush1.msra.mxu0 0.0
    %241 = vmatprep.subr.mxu0 0.0
    %242 = vmatpush1.msra.mxu0 0.0
    %243 = vmatprep.subr.mxu0 0.0
    %244 = vmatpush1.msra.mxu0 0.0
    %245 = vmatprep.subr.mxu0 0.0
    %246 = vmatpush1.msra.mxu0 0.0
    %247 = vmatprep.subr.mxu0 0.0
    %248 = vmatpush1.msra.mxu0 0.0
    %249 = vmatprep.subr.mxu0 0.0
    %250 = vmatpush1.msra.mxu0 0.0
    %251 = vmatprep.subr.mxu0 0.0
    %252 = vmatpush1.msra.mxu0 0.0
    %253 = vmatprep.subr.mxu0 0.0
    %254 = vmatpush1.msra.mxu0 0.0
    %255 = vmatprep.subr.mxu0 0.0
    %256 = vmatpush1.msra.mxu0 0.0
    %257 = vmatprep.subr.mxu0 0.0
    %258 = vmatpush1.msra.mxu0 0.0
    %259 = vmatprep.subr.mxu0 0.0
    %260 = vmatpush1.msra.mxu0 0.0
    %261 = vmatprep.subr.mxu0 0.0
    %262 = vmatpush1.msra.mxu0 0.0
    %263 = vmatprep.subr.mxu0 0.0
    %264 = vmatpush1.msra.mxu0 0.0
    %265 = vmatprep.subr.mxu0 0.0
    %266 = vmatpush1.msra.mxu0 0.0
    %267 = vmatprep.mubr.f32.mxu0 0.0
    %268 = vmatmul.mubr.f32.gmra.mrb[0].mxu0 %v201
    %v269 = vpop.f32.mrb[0].mxu0
    %v270 = vadd.f32 %v198, %v269
    %v271 = vpop.f32.mrb[0].mxu0
    %272 = vdwg.mxu0
    %v273 = vld [vmem:[%s8] sm:$0x1]
    %v274 = vlaneseq
    %v275 = vshrl.u32 %v274, 7
    %v276 = vsub.s32 0, %v275
    %v277 = vrot.slane %v273, %v276
    %v278 = vadd.f32 %v270, %v277
    %v279 = vmax.f32 %v278, 0.0
    %v280 = vld [vmem:[#allocation8] sm:$0xff]
    %v281 = vld [vmem:[#allocation8 + $0x8] sm:$0xff]
    %v282 = vld [vmem:[#allocation8 + $0x10] sm:$0xff]
    %v283 = vld [vmem:[#allocation8 + $0x18] sm:$0xff]
    %v284 = vld [vmem:[%s8 + $0x1] sm:$0x1]
    %v285 = vlaneseq
    %v286 = vshrl.u32 %v285, 7
    %v287 = vsub.s32 0, %v286
    %v288 = vrot.slane %v284, %v287
    %vm289 = vcmask 261120
    %v291 = vsel %vm289, %v279, 0
    %293 = vmatprep.subr.mxu0 0.0
    %294 = vmatpush1.msra.mxu0 %v280
    %295 = vmatprep.subr.mxu0 0.0
    %296 = vmatpush1.msra.mxu0 %v281
    %297 = vmatprep.subr.mxu0 0.0
    %298 = vmatpush1.msra.mxu0 %v282
    %299 = vmatprep.subr.mxu0 0.0
    %300 = vmatpush1.msra.mxu0 %v283
    %301 = vmatprep.subr.mxu0 0.0
    %302 = vmatpush1.msra.mxu0 0.0
    %303 = vmatprep.subr.mxu0 0.0
    %304 = vmatpush1.msra.mxu0 0.0
    %305 = vmatprep.subr.mxu0 0.0
    %306 = vmatpush1.msra.mxu0 0.0
    %307 = vmatprep.subr.mxu0 0.0
    %308 = vmatpush1.msra.mxu0 0.0
    %309 = vmatprep.subr.mxu0 0.0
    %310 = vmatpush1.msra.mxu0 0.0
    %311 = vmatprep.subr.mxu0 0.0
    %312 = vmatpush1.msra.mxu0 0.0
    %313 = vmatprep.subr.mxu0 0.0
    %314 = vmatpush1.msra.mxu0 0.0
    %315 = vmatprep.subr.mxu0 0.0
    %316 = vmatpush1.msra.mxu0 0.0
    %317 = vmatprep.subr.mxu0 0.0
    %318 = vmatpush1.msra.mxu0 0.0
    %319 = vmatprep.subr.mxu0 0.0
    %320 = vmatpush1.msra.mxu0 0.0
    %321 = vmatprep.subr.mxu0 0.0
    %322 = vmatpush1.msra.mxu0 0.0
    %323 = vmatprep.subr.mxu0 0.0
    %324 = vmatpush1.msra.mxu0 0.0
    %325 = vmatprep.subr.mxu0 0.0
    %326 = vmatpush1.msra.mxu0 0.0
    %327 = vmatprep.subr.mxu0 0.0
    %328 = vmatpush1.msra.mxu0 0.0
    %329 = vmatprep.subr.mxu0 0.0
    %330 = vmatpush1.msra.mxu0 0.0
    %331 = vmatprep.subr.mxu0 0.0
    %332 = vmatpush1.msra.mxu0 0.0
    %333 = vmatprep.subr.mxu0 0.0
    %334 = vmatpush1.msra.mxu0 0.0
    %335 = vmatprep.subr.mxu0 0.0
    %336 = vmatpush1.msra.mxu0 0.0
    %337 = vmatprep.subr.mxu0 0.0
    %338 = vmatpush1.msra.mxu0 0.0
    %339 = vmatprep.subr.mxu0 0.0
    %340 = vmatpush1.msra.mxu0 0.0
    %341 = vmatprep.subr.mxu0 0.0
    %342 = vmatpush1.msra.mxu0 0.0
    %343 = vmatprep.subr.mxu0 0.0
    %344 = vmatpush1.msra.mxu0 0.0
    %345 = vmatprep.subr.mxu0 0.0
    %346 = vmatpush1.msra.mxu0 0.0
    %347 = vmatprep.subr.mxu0 0.0
    %348 = vmatpush1.msra.mxu0 0.0
    %349 = vmatprep.subr.mxu0 0.0
    %350 = vmatpush1.msra.mxu0 0.0
    %351 = vmatprep.subr.mxu0 0.0
    %352 = vmatpush1.msra.mxu0 0.0
    %353 = vmatprep.subr.mxu0 0.0
    %354 = vmatpush1.msra.mxu0 0.0
    %355 = vmatprep.subr.mxu0 0.0
    %356 = vmatpush1.msra.mxu0 0.0
    %357 = vmatprep.mubr.f32.mxu0 0.0
    %358 = vmatmul.mubr.f32.gmra.mrb[0].mxu0 %v291
    %v359 = vpop.f32.mrb[0].mxu0
    %v360 = vadd.f32 %v288, %v359
    %v361 = vpop.f32.mrb[0].mxu0
    %362 = vdwg.mxu0
    %v363 = vmax.f32 %v360, 0.0
    %v364 = vld [vmem:[#allocation10] sm:$0xff]
    %v365 = vld [vmem:[#allocation10 + $0x8] sm:$0xff]
    %v366 = vld [vmem:[#allocation10 + $0x10] sm:$0xff]
    %v367 = vld [vmem:[#allocation10 + $0x18] sm:$0xff]
    %v368 = vld [vmem:[%s8 + $0x2] sm:$0x1]
    %v369 = vlaneseq
    %v370 = vshrl.u32 %v369, 7
    %v371 = vsub.s32 0, %v370
    %v372 = vrot.slane %v368, %v371
    %v374 = vsel %vm289, %v363, 0
    %376 = vmatprep.subr.mxu0 0.0
    %377 = vmatpush1.msra.mxu0 %v364
    %378 = vmatprep.subr.mxu0 0.0
    %379 = vmatpush1.msra.mxu0 %v365
    %380 = vmatprep.subr.mxu0 0.0
    %381 = vmatpush1.msra.mxu0 %v366
    %382 = vmatprep.subr.mxu0 0.0
    %383 = vmatpush1.msra.mxu0 %v367
    %384 = vmatprep.subr.mxu0 0.0
    %385 = vmatpush1.msra.mxu0 0.0
    %386 = vmatprep.subr.mxu0 0.0
    %387 = vmatpush1.msra.mxu0 0.0
    %388 = vmatprep.subr.mxu0 0.0
    %389 = vmatpush1.msra.mxu0 0.0
    %390 = vmatprep.subr.mxu0 0.0
    %391 = vmatpush1.msra.mxu0 0.0
    %392 = vmatprep.subr.mxu0 0.0
    %393 = vmatpush1.msra.mxu0 0.0
    %394 = vmatprep.subr.mxu0 0.0
    %395 = vmatpush1.msra.mxu0 0.0
    %396 = vmatprep.subr.mxu0 0.0
    %397 = vmatpush1.msra.mxu0 0.0
    %398 = vmatprep.subr.mxu0 0.0
    %399 = vmatpush1.msra.mxu0 0.0
    %400 = vmatprep.subr.mxu0 0.0
    %401 = vmatpush1.msra.mxu0 0.0
    %402 = vmatprep.subr.mxu0 0.0
    %403 = vmatpush1.msra.mxu0 0.0
    %404 = vmatprep.subr.mxu0 0.0
    %405 = vmatpush1.msra.mxu0 0.0
    %406 = vmatprep.subr.mxu0 0.0
    %407 = vmatpush1.msra.mxu0 0.0
    %408 = vmatprep.subr.mxu0 0.0
    %409 = vmatpush1.msra.mxu0 0.0
    %410 = vmatprep.subr.mxu0 0.0
    %411 = vmatpush1.msra.mxu0 0.0
    %412 = vmatprep.subr.mxu0 0.0
    %413 = vmatpush1.msra.mxu0 0.0
    %414 = vmatprep.subr.mxu0 0.0
    %415 = vmatpush1.msra.mxu0 0.0
    %416 = vmatprep.subr.mxu0 0.0
    %417 = vmatpush1.msra.mxu0 0.0
    %418 = vmatprep.subr.mxu0 0.0
    %419 = vmatpush1.msra.mxu0 0.0
    %420 = vmatprep.subr.mxu0 0.0
    %421 = vmatpush1.msra.mxu0 0.0
    %422 = vmatprep.subr.mxu0 0.0
    %423 = vmatpush1.msra.mxu0 0.0
    %424 = vmatprep.subr.mxu0 0.0
    %425 = vmatpush1.msra.mxu0 0.0
    %426 = vmatprep.subr.mxu0 0.0
    %427 = vmatpush1.msra.mxu0 0.0
    %428 = vmatprep.subr.mxu0 0.0
    %429 = vmatpush1.msra.mxu0 0.0
    %430 = vmatprep.subr.mxu0 0.0
    %431 = vmatpush1.msra.mxu0 0.0
    %432 = vmatprep.subr.mxu0 0.0
    %433 = vmatpush1.msra.mxu0 0.0
    %434 = vmatprep.subr.mxu0 0.0
    %435 = vmatpush1.msra.mxu0 0.0
    %436 = vmatprep.subr.mxu0 0.0
    %437 = vmatpush1.msra.mxu0 0.0
    %438 = vmatprep.subr.mxu0 0.0
    %439 = vmatpush1.msra.mxu0 0.0
    %440 = vmatprep.mubr.f32.mxu0 0.0
    %441 = vmatmul.mubr.f32.gmra.mrb[0].mxu0 %v374
    %v442 = vpop.f32.mrb[0].mxu0
    %v443 = vadd.f32 %v372, %v442
    %v444 = vpop.f32.mrb[0].mxu0
    %445 = vdwg.mxu0
    %v446 = vmax.f32 %v443, 0.0
    %v447 = vld [vmem:[#allocation11] sm:$0xff]
    %v448 = vld [vmem:[#allocation11 + $0x8] sm:$0xff]
    %v449 = vld [vmem:[#allocation11 + $0x10] sm:$0xff]
    %v450 = vld [vmem:[#allocation11 + $0x18] sm:$0xff]
    %v451 = vld [vmem:[#allocation11 + $0x20] sm:$0xff]
    %v452 = vld [vmem:[#allocation11 + $0x28] sm:$0xff]
    %v453 = vld [vmem:[#allocation11 + $0x30] sm:$0xff]
    %v454 = vld [vmem:[#allocation11 + $0x38] sm:$0xff]
    %v455 = vld [vmem:[%s9] sm:$0x3]
    %v457 = vlaneseq
    %v458 = vshrl.u32 %v457, 7
    %v459 = vsub.s32 0, %v458
    %v460 = vrot.slane %v455, %v459
    %v461 = vlaneseq
    %v462 = vshrl.u32 %v461, 7
    %v463 = vsub.s32 1, %v462
    %v464 = vrot.slane %v455, %v463
    %v468 = vsel %vm289, %v446, 0
    %470 = vmatprep.subr.mxu0 %v448
    %471 = vmatpush1.msra.mxu0 %v447
    %472 = vmatprep.subr.mxu0 %v450
    %473 = vmatpush1.msra.mxu0 %v449
    %474 = vmatprep.subr.mxu0 %v452
    %475 = vmatpush1.msra.mxu0 %v451
    %476 = vmatprep.subr.mxu0 %v454
    %477 = vmatpush1.msra.mxu0 %v453
    %478 = vmatprep.subr.mxu0 0.0
    %479 = vmatpush1.msra.mxu0 0.0
    %480 = vmatprep.subr.mxu0 0.0
    %481 = vmatpush1.msra.mxu0 0.0
    %482 = vmatprep.subr.mxu0 0.0
    %483 = vmatpush1.msra.mxu0 0.0
    %484 = vmatprep.subr.mxu0 0.0
    %485 = vmatpush1.msra.mxu0 0.0
    %486 = vmatprep.subr.mxu0 0.0
    %487 = vmatpush1.msra.mxu0 0.0
    %488 = vmatprep.subr.mxu0 0.0
    %489 = vmatpush1.msra.mxu0 0.0
    %490 = vmatprep.subr.mxu0 0.0
    %491 = vmatpush1.msra.mxu0 0.0
    %492 = vmatprep.subr.mxu0 0.0
    %493 = vmatpush1.msra.mxu0 0.0
    %494 = vmatprep.subr.mxu0 0.0
    %495 = vmatpush1.msra.mxu0 0.0
    %496 = vmatprep.subr.mxu0 0.0
    %497 = vmatpush1.msra.mxu0 0.0
    %498 = vmatprep.subr.mxu0 0.0
    %499 = vmatpush1.msra.mxu0 0.0
    %500 = vmatprep.subr.mxu0 0.0
    %501 = vmatpush1.msra.mxu0 0.0
    %502 = vmatprep.subr.mxu0 0.0
    %503 = vmatpush1.msra.mxu0 0.0
    %504 = vmatprep.subr.mxu0 0.0
    %505 = vmatpush1.msra.mxu0 0.0
    %506 = vmatprep.subr.mxu0 0.0
    %507 = vmatpush1.msra.mxu0 0.0
    %508 = vmatprep.subr.mxu0 0.0
    %509 = vmatpush1.msra.mxu0 0.0
    %510 = vmatprep.subr.mxu0 0.0
    %511 = vmatpush1.msra.mxu0 0.0
    %512 = vmatprep.subr.mxu0 0.0
    %513 = vmatpush1.msra.mxu0 0.0
    %514 = vmatprep.subr.mxu0 0.0
    %515 = vmatpush1.msra.mxu0 0.0
    %516 = vmatprep.subr.mxu0 0.0
    %517 = vmatpush1.msra.mxu0 0.0
    %518 = vmatprep.subr.mxu0 0.0
    %519 = vmatpush1.msra.mxu0 0.0
    %520 = vmatprep.subr.mxu0 0.0
    %521 = vmatpush1.msra.mxu0 0.0
    %522 = vmatprep.subr.mxu0 0.0
    %523 = vmatpush1.msra.mxu0 0.0
    %524 = vmatprep.subr.mxu0 0.0
    %525 = vmatpush1.msra.mxu0 0.0
    %526 = vmatprep.subr.mxu0 0.0
    %527 = vmatpush1.msra.mxu0 0.0
    %528 = vmatprep.subr.mxu0 0.0
    %529 = vmatpush1.msra.mxu0 0.0
    %530 = vmatprep.subr.mxu0 0.0
    %531 = vmatpush1.msra.mxu0 0.0
    %532 = vmatprep.subr.mxu0 0.0
    %533 = vmatpush1.msra.mxu0 0.0
    %534 = vmatprep.mubr.f32.mxu0 0.0
    %535 = vmatmul.mubr.f32.gmra.mrb[0].mxu0 %v468
    %v536 = vpop.f32.mrb[0].mxu0
    %v537 = vadd.f32 %v460, %v536
    %v538 = vpop.f32.mrb[0].mxu0
    %v539 = vadd.f32 %v464, %v538
    %540 = vdwg.mxu0
    %v541 = vtanh.pop %v539
    %v542 = vadd.f32 %v541, 1.0
    %v543 = vmul.f32 %v542, 6.0
    %v544 = vadd.f32 %v543, -10.0
    %v545 = vmul.f32 %v544, 1.442695
    %v546 = vpow.pop %v545
    %v547 = vmul.f32 %v116, %v546
    %v548 = vadd.f32 %v537, %v547
    %v549 = vlaneseq
    %v550 = vand.u32 %v549, 127
    %vm551 = vcmp.lt.s32.totalorder %v550, 4
    %v552 = vmul.f32 %v116, -0.5
    %v553 = vmul.f32 %v552, %v116
    %v554 = vsub.f32 %v553, %v544
    %v555 = vsel %vm551, %v554, 0.0
    %556 = vadd.xlane.f32.xlu0 %v555
    %v557 = vpop.xlane.xlu0 %556
    %v558 = vsub.f32 %v557, 3.675754
    %v559 = vtanh.pop %v537
    %v560 = vtanh.pop %v548
    %v561 = vmul.f32 %v560, %v560
    %v562 = vsub.f32 1.0, %v561
    %v563 = vmax.f32 %v562, 0.0
    %v564 = vadd.f32 %v563, 1e-06
    %v565 = vlog2.pop %v564
    %v566 = vmul.f32 %v565, 0.6931472
    %v567 = vsel %vm551, %v566, 0.0
    %568 = vadd.xlane.f32.xlu0 %v567
    %v569 = vpop.xlane.xlu0 %568
    %v570 = vsub.f32 %v558, %v569
    %571 = vst [vmem:[#allocation13] sm:$0xff] %v559
    %572 = vst [vmem:[#allocation13 + $0x8] sm:$0xff] %v560
    %573 = vst [vmem:[#allocation13 + $0x10] sm:$0xff] %v544
    %574 = vst [vmem:[#allocation13 + $0x18] sm:$0xff] %v570
    // Predicated region
    $region66: #{tpu_custom_call.1} parent=1 // pred_check
      _
    $region67: #{tpu_custom_call.1} parent=1 // pred_check_branch
      %576 = sbr.rel (0) target = $region69
    $region68: #{tpu_custom_call.1} parent=1 // pred_region
      %s578 = ssub.s32 512, 512
      %579 = vsyncadd [#allocation4], %s578
      %s581 = sshll.u32 [#allocation13], 4
      %s582 = int_to_ptr.vmem [resolvable:$true] %s581
      %584 = dma.vmem_to_hbm [thread:$0]  %s582, 512, %s10, [#allocation4]
    $region69: #{tpu_custom_call.1} parent=1 // pred_fallthru
      _
    // Predicated region
    $region70: #{tpu_custom_call.1} parent=1 // pred_check
      _
    $region71: #{tpu_custom_call.1} parent=1 // pred_check_branch
      %586 = sbr.rel (0) target = $region73
    $region72: #{tpu_custom_call.1} parent=1 // pred_region
      %587 = dma.done [#allocation4], 512
    $region73: #{tpu_custom_call.1} parent=1 // pred_fallthru
      _
    %588 = vsyncpa [#allocation3], 1
    %589 = vsyncpa [#allocation6], 1
    %590 = vsyncpa [#allocation9], 1
    %591 = vsyncpa [#allocation12], 1
    %592 = vsyncpa [#allocation4], 1

</llo_original>
